<compile_context>
chip_gen: v5e
topology: v5e:2x2
jax: 0.10.0
libtpu: 0.0.40
codegen_flags: <defaults>
</compile_context>

<pallas_src>
import jax
import jax.numpy as jnp
from jax.experimental import pallas as pl
from jax.experimental.pallas import tpu as pltpu


def _nop_kernel(x_ref, o_ref):
    # Identity: copy the current VMEM tile straight to the output tile.
    o_ref[...] = x_ref[...]


_MAX_BLOCK_BYTES = 2 * 1024 * 1024  # per-tile budget (double-buffered in+out ~ 8 MiB VMEM)


def _pick_2d_view(shape, n):
    """Pick a (rows, cols) view of the flat data that satisfies TPU tiling.

    Prefers a lane-dense `cols` that is a multiple of 128 (unmasked vst path);
    otherwise keeps the original trailing dim, which as a full-extent last dim
    always satisfies the (8, 128) block-shape rule.
    """
    for cols in (1024, 512, 256, 128):
        if n % cols == 0:
            return n // cols, cols
    cols = shape[-1] if len(shape) >= 1 and shape[-1] > 0 else 1
    return n // cols, cols


def nop_forward(scores: jax.Array) -> jax.Array:
    """Pallas implementation of NOP.forward(scores) -> scores (identity)."""
    orig_shape = scores.shape
    n = scores.size
    if n == 0:
        return scores  # nothing to move

    rows, cols = _pick_2d_view(orig_shape, n)
    x2d = scores.reshape(rows, cols)  # layout-compatible reshape: no HBM copy

    itemsize = jnp.dtype(scores.dtype).itemsize
    # Sublane packing: 8 rows/vreg for 32-bit, 16 for 16-bit, 32 for 8-bit dtypes.
    row_align = 8 * max(1, 4 // itemsize)

    if rows <= row_align:
        block_rows = rows  # full extent along rows -> always a legal tile
    else:
        budget_rows = max(
            row_align, (_MAX_BLOCK_BYTES // (cols * itemsize)) // row_align * row_align
        )
        block_rows = min((rows // row_align) * row_align, budget_rows)
    grid = (pl.cdiv(rows, block_rows),)

    out2d = pl.pallas_call(
        _nop_kernel,
        out_shape=jax.ShapeDtypeStruct((rows, cols), x2d.dtype),
        grid_spec=pltpu.PrefetchScalarGridSpec(
            num_scalar_prefetch=0,
            grid=grid,
            in_specs=[pl.BlockSpec((block_rows, cols), lambda i: (i, 0))],
            out_specs=pl.BlockSpec((block_rows, cols), lambda i: (i, 0)),
        ),
        compiler_params=pltpu.CompilerParams(
            dimension_semantics=("parallel",),
        ),
        cost_estimate=pl.CostEstimate(
            flops=0, transcendentals=0, bytes_accessed=2 * n * itemsize
        ),
    )(x2d)

    return out2d.reshape(orig_shape)


if __name__ == "__main__":
    key = jax.random.PRNGKey(0)
    # Small NCHW "scores" tensor, consistent with the module's usage.
    x = jax.random.normal(key, (2, 4, 16, 16), dtype=jnp.float32)

    nop_jit = jax.jit(nop_forward)
    y = nop_jit(x)
    jax.block_until_ready(y)

    # Identity check.
    assert y.shape == x.shape and y.dtype == x.dtype
    assert bool(jnp.all(y == x))
    print("KERNEL_OK")
</pallas_src>

<mosaic_0001>
module attributes {stable_mosaic.version = 11 : i64} {
  func.func @_nop_kernel(%arg0: i32, %arg1: memref<2x1024xf32, #tpu.memory_space<vmem>>, %arg2: memref<2x1024xf32, #tpu.memory_space<vmem>>) attributes {dimension_semantics = [#tpu.dimension_semantics<parallel>], iteration_bounds = array<i64: 1>, scalar_prefetch = 0 : i64, scratch_operands = 0 : i64, tpu.core_type = #tpu.core_type<tc>, window_params = [{transform_indices = @transform_0, window_bounds = array<i64: 2, 1024>}, {transform_indices = @transform_1, window_bounds = array<i64: 2, 1024>}]} {
    %c0 = arith.constant 0 : index
    %c0_0 = arith.constant 0 : index
    %0 = vector.load %arg1[%c0, %c0_0] : memref<2x1024xf32, #tpu.memory_space<vmem>>, vector<2x1024xf32>
    %c0_1 = arith.constant 0 : index
    %c0_2 = arith.constant 0 : index
    %1 = vector.load %arg2[%c0_1, %c0_2] : memref<2x1024xf32, #tpu.memory_space<vmem>>, vector<2x1024xf32>
    tpu.vector_store %arg2[%c0_1, %c0_2], %0 {strides = array<i32>} : memref<2x1024xf32, #tpu.memory_space<vmem>>, vector<2x1024xf32>,
    return
  }
  func.func @transform_0(%arg0: i32) -> (i32, i32) {
    %c0_i32 = arith.constant 0 : i32
    %c0_i32_0 = arith.constant 0 : i32
    return %arg0, %c0_i32 : i32, i32
  }
  func.func @transform_1(%arg0: i32) -> (i32, i32) {
    %c0_i32 = arith.constant 0 : i32
    %c0_i32_0 = arith.constant 0 : i32
    return %arg0, %c0_i32 : i32, i32
  }
}

</mosaic_0001>

<llo_original>
// kernel: nop_forward.1
$region0: #{nop_forward.1}
  #allocation0 [shape = 'u32[]', space=smem, size = 0x4, offset = 0x4, fixed_abs, tag = 'smem constant byte address 0x4 - core index']
  #allocation1 [shape = 'u32[72,128]{1,0:T(1,128)}', space=vmem, size = 0x9000, scoped, tag = 'internal scratch']
  %s0 = inlined_call_operand.vmem [shape: f32[2,1024], index: 0, kind: input, shape index: {}]
  %s1 = inlined_call_operand.vmem [shape: f32[2,1024], index: 1, kind: output, shape index: {}]
  %s2 = sld [smem:[#allocation0]]
  $region14: #{nop_forward.1} parent=0
    _
  %s4 = ssub.s32 1, %s2
  %s5 = scalar_select 0, %s4, %s2
  // Predicated region
  $region2: #{nop_forward.1} parent=0 // pred_check
    _
  $region3: #{nop_forward.1} parent=0 // pred_check_branch
    %7 = sbr.rel (0) target = $region5
  $region4: #{nop_forward.1} parent=0 // pred_region
    _
  $region5: #{nop_forward.1} parent=0 // pred_fallthru
    _
  %v8 = vld [vmem:[%s0] sm:$0xff]
  %v9 = vld [vmem:[%s0 + $0x8] sm:$0xff]
  %10 = vst [vmem:[%s1] sm:$0xff] %v8
  %11 = vst [vmem:[%s1 + $0x8] sm:$0xff] %v9
  // Predicated region
  $region6: #{nop_forward.1} parent=0 // pred_check
    _
  $region7: #{nop_forward.1} parent=0 // pred_check_branch
    %13 = sbr.rel (0) target = $region9
  $region8: #{nop_forward.1} parent=0 // pred_region
    _
  $region9: #{nop_forward.1} parent=0 // pred_fallthru
    _
  // Predicated region
  $region10: #{nop_forward.1} parent=0 // pred_check
    _
  $region11: #{nop_forward.1} parent=0 // pred_check_branch
    %15 = sbr.rel (0) target = $region13
  $region12: #{nop_forward.1} parent=0 // pred_region
    _
  $region13: #{nop_forward.1} parent=0 // pred_fallthru
    _

</llo_original>
